<compile_context>
chip_gen: v6e
topology: v6e:2x2x1
jax: 0.10.0
libtpu: 0.0.40
codegen_flags: <defaults>
</compile_context>

<pallas_src>
import jax
import jax.numpy as jnp
from jax import lax
from jax.experimental import pallas as pl
from jax.experimental.pallas import tpu as pltpu

TEMPERATURE = 0.07
BASE_TEMPERATURE = 0.07
_NEG_BIG = -1e30  # pre-exp diagonal knockout: exact zero contribution


def _pick_tile(m):
    for t in (512, 256, 128, 64, 32, 16, 8):
        if m % t == 0:
            return t
    return m  # single full-size tile (equals the array dim, so layout-legal)


def _loss_kernel(q_ref, k_ref, out_ref, m_run, l_run, m_c, l_c, diag):
    # Grid = (row tiles, half, key tiles).  half 0 -> shape keys (cross),
    # half 1 -> sketch keys (self).  q_ref: (tq, D) sketch rows of this row
    # tile; k_ref: (tk, D) key rows of this (half, key-tile).
    qi = pl.program_id(0)
    h = pl.program_id(1)
    ki = pl.program_id(2)
    nk = pl.num_programs(2)

    # When the self half starts, freeze the finished cross-half state.
    @pl.when((ki == 0) & (h == 1))
    def _():
        m_c[...] = m_run[...]
        l_c[...] = l_run[...]

    # (Re)initialize the running max / exp-sum at the start of each half.
    @pl.when(ki == 0)
    def _():
        m_run[...] = jnp.full_like(m_run, -jnp.inf)
        l_run[...] = jnp.zeros_like(l_run)

    # Upcast per tile (bf16 callers keep a narrow DMA), then L2-normalize:
    #   x / max(||x||, 1e-12) == x * rsqrt(max(||x||^2, 1e-24))
    q = q_ref[...].astype(jnp.float32)
    k = k_ref[...].astype(jnp.float32)
    q_n = q * lax.rsqrt(jnp.maximum(jnp.sum(q * q, axis=1, keepdims=True), 1e-24))
    k_n = k * lax.rsqrt(jnp.maximum(jnp.sum(k * k, axis=1, keepdims=True), 1e-24))
    # Fold 1/temperature into the (small) query tile once.
    q_s = q_n * jnp.float32(1.0 / TEMPERATURE)

    # Contract on the feature axis directly (RHS-transposed natively on MXU).
    dn = (((1,), (1,)), ((), ()))
    s = lax.dot_general(q_s, k_n, dn, preferred_element_type=jnp.float32)  # (tq, tk)

    # Row max of the *unmasked* tile (the reference takes max before masking).
    tile_max = jnp.max(s, axis=1, keepdims=True)
    m_prev = m_run[...]
    m_new = jnp.maximum(m_prev, tile_max)
    corr = jnp.exp(m_prev - m_new)  # exp(-inf)=0 on the first tile of a half

    # With tq == tk, diagonal entries only live in tiles where qi == ki.
    is_diag_tile = qi == ki

    @pl.when(is_diag_tile)
    def _():
        on_diag = (lax.broadcasted_iota(jnp.int32, s.shape, 0)
                   == lax.broadcasted_iota(jnp.int32, s.shape, 1))
        p = jnp.exp(jnp.where(on_diag, jnp.float32(_NEG_BIG), s) - m_new)
        l_run[...] = corr * l_run[...] + jnp.sum(p, axis=1, keepdims=True)

        # diag(total)/T comes from the cross half's diagonal tile only.
        @pl.when(h == 0)
        def _():
            diag[...] = jnp.sum(jnp.where(on_diag, s, 0.0), axis=1, keepdims=True)

    @pl.when(jnp.logical_not(is_diag_tile))
    def _():
        p = jnp.exp(s - m_new)
        l_run[...] = corr * l_run[...] + jnp.sum(p, axis=1, keepdims=True)

    m_run[...] = m_new

    # Last key tile of the self half: emit this row tile's log-probabilities.
    # (The two exp-sums use different max shifts -- torch-source parity.)
    @pl.when((h == 1) & (ki == nk - 1))
    def _():
        log_prob = (diag[...] - m_c[...]) - jnp.log(l_c[...] + l_run[...])
        out_ref[...] = log_prob.astype(out_ref.dtype)


def contrastive_loss_2(embeddings, *, tile=None):
    """embeddings: (B, D), B even (first half sketches, second half shapes).
    Returns shape (1,), matching the torch module's `.mean(0)` output."""
    B, D = embeddings.shape
    assert B % 2 == 0, "batch must contain an equal number of sketch/shape rows"
    m = B // 2
    tq = tk = tile if tile is not None else _pick_tile(m)
    assert m % tq == 0, "row/key tile must divide the half-batch size"
    num_q = m // tq
    num_k = m // tk

    # (B, D) -> (2, m, D): slab 0 = sketch rows, slab 1 = shape rows.  Pure
    # layout plumbing; the same array is passed twice (query view + key view).
    emb3 = embeddings.reshape(2, m, D)

    q_spec = pl.BlockSpec((pl.Squeezed(), tq, D), lambda qi, h, ki: (0, qi, 0))
    k_spec = pl.BlockSpec((pl.Squeezed(), tk, D), lambda qi, h, ki: (1 - h, ki, 0))
    out_spec = pl.BlockSpec((tq, 1), lambda qi, h, ki: (qi, 0))

    # VMEM limit sized from the actual per-step buffers (double-buffered q/k
    # tiles + (tq, tk) temporaries), with headroom below v7x's 64 MiB ceiling.
    itemsize = 4
    need = (2 * 2 * (tq * D + tk * D) * itemsize        # pipelined q/k blocks
            + 8 * tq * tk * itemsize                    # s / exp / iota temps
            + 8 * tq * itemsize                         # scratch columns
            + (1 << 20))
    vmem_limit = int(min(max(2 * need, 32 << 20), 48 << 20))

    cost = pl.CostEstimate(
        flops=int(4 * m * m * D),
        transcendentals=int(2 * m * m),
        bytes_accessed=int(itemsize * (m * D + 2 * m * D * num_q + m)),
    )

    log_prob = pl.pallas_call(
        _loss_kernel,
        out_shape=jax.ShapeDtypeStruct((m, 1), jnp.float32),
        grid_spec=pltpu.PrefetchScalarGridSpec(
            num_scalar_prefetch=0,
            grid=(num_q, 2, num_k),
            in_specs=[q_spec, k_spec],
            out_specs=out_spec,
            scratch_shapes=[pltpu.VMEM((tq, 1), jnp.float32)] * 5,
        ),
        compiler_params=pltpu.CompilerParams(
            dimension_semantics=("parallel", "arbitrary", "arbitrary"),
            vmem_limit_bytes=vmem_limit,
        ),
        cost_estimate=cost,
    )(emb3, emb3)

    # Tiny O(m) scalar reduce kept in the wrapper so the row-tile grid axis can
    # stay "parallel" (megacore-safe) without cross-core scratch accumulation.
    nce = -(TEMPERATURE / BASE_TEMPERATURE) * jnp.mean(log_prob, axis=0)
    return nce


def _reference(embeddings):
    """Pure-JAX reference mirroring the PyTorch forward exactly."""
    emb = embeddings.astype(jnp.float32)
    norm = jnp.sqrt(jnp.sum(emb * emb, axis=1, keepdims=True))
    emb_n = emb / jnp.maximum(norm, 1e-12)
    B = emb.shape[0]
    m = B // 2
    sketchs, shapes_ = emb_n[:m], emb_n[m:]
    total = (sketchs @ shapes_.T) / TEMPERATURE
    logits = total - jnp.max(total, axis=1, keepdims=True)
    mask = 1.0 - jnp.eye(m, dtype=jnp.float32)
    exp_logits = jnp.exp(logits) * mask
    ss_total = (sketchs @ sketchs.T) / TEMPERATURE
    logits_ss = ss_total - jnp.max(ss_total, axis=1, keepdims=True)
    exp_logits_ss = jnp.exp(logits_ss) * mask
    diag = jnp.diag(logits).reshape(-1, 1)
    log_prob = diag - jnp.log(exp_logits.sum(1, keepdims=True)
                              + exp_logits_ss.sum(1, keepdims=True))
    mean_log = jnp.mean(log_prob, axis=0)
    return -(TEMPERATURE / BASE_TEMPERATURE) * mean_log


if __name__ == "__main__":
    key = jax.random.PRNGKey(0)
    k_small, k_big = jax.random.split(key)

    # Small shape implied by the module: mini_batch = 4, hidden = 32.
    B, D = 8, 32
    emb_small = jax.random.normal(k_small, (B, D), dtype=jnp.float32)
    nce = contrastive_loss_2(emb_small)
    jax.block_until_ready(nce)
    ref = _reference(emb_small)
    assert nce.shape == (1,)
    assert jnp.allclose(nce, ref, rtol=1e-4, atol=1e-4), (nce, ref)

    # Exercise the tiled / online-softmax path: m=16, tile=8 -> grid (2, 2, 2)
    # (multiple row tiles, multiple key tiles, off-diagonal unmasked tiles).
    emb_big = jax.random.normal(k_big, (32, 64), dtype=jnp.float32)
    nce2 = contrastive_loss_2(emb_big, tile=8)
    jax.block_until_ready(nce2)
    ref2 = _reference(emb_big)
    assert jnp.allclose(nce2, ref2, rtol=1e-4, atol=1e-4), (nce2, ref2)

    print("KERNEL_OK")
</pallas_src>

<mosaic_0001>
module attributes {stable_mosaic.version = 11 : i64} {
  func.func @_loss_kernel(%arg0: i32, %arg1: i32, %arg2: i32, %arg3: memref<1x4x32xf32, #tpu.memory_space<vmem>>, %arg4: memref<1x4x32xf32, #tpu.memory_space<vmem>>, %arg5: memref<4x1xf32, #tpu.memory_space<vmem>>, %arg6: memref<4x1xf32, #tpu.memory_space<vmem>>, %arg7: memref<4x1xf32, #tpu.memory_space<vmem>>, %arg8: memref<4x1xf32, #tpu.memory_space<vmem>>, %arg9: memref<4x1xf32, #tpu.memory_space<vmem>>, %arg10: memref<4x1xf32, #tpu.memory_space<vmem>>) attributes {dimension_semantics = [#tpu.dimension_semantics<parallel>, #tpu.dimension_semantics<arbitrary>, #tpu.dimension_semantics<arbitrary>], iteration_bounds = array<i64: 1, 2, 1>, scalar_prefetch = 0 : i64, scratch_operands = 5 : i64, tpu.core_type = #tpu.core_type<tc>, window_params = [{transform_indices = @transform_0, window_bounds = array<i64: 1, 4, 32>}, {transform_indices = @transform_1, window_bounds = array<i64: 1, 4, 32>}, {transform_indices = @transform_2, window_bounds = array<i64: 4, 1>}]} {
    %c0_i32 = arith.constant 0 : i32
    %0 = arith.cmpi eq, %arg2, %c0_i32 : i32
    %c1_i32 = arith.constant 1 : i32
    %1 = arith.cmpi eq, %arg1, %c1_i32 : i32
    %2 = arith.andi %0, %1 : i1
    %3 = arith.extui %2 : i1 to i32
    %c0_i32_0 = arith.constant 0 : i32
    %4 = arith.cmpi ne, %3, %c0_i32_0 : i32
    scf.if %4 {
      %c0_23 = arith.constant 0 : index
      %c0_24 = arith.constant 0 : index
      %49 = vector.load %arg6[%c0_23, %c0_24] : memref<4x1xf32, #tpu.memory_space<vmem>>, vector<4x1xf32>
      %c0_25 = arith.constant 0 : index
      %c0_26 = arith.constant 0 : index
      %50 = vector.load %arg8[%c0_25, %c0_26] : memref<4x1xf32, #tpu.memory_space<vmem>>, vector<4x1xf32>
      tpu.vector_store %arg8[%c0_25, %c0_26], %49 {strides = array<i32>} : memref<4x1xf32, #tpu.memory_space<vmem>>, vector<4x1xf32>,
      %c0_27 = arith.constant 0 : index
      %c0_28 = arith.constant 0 : index
      %51 = vector.load %arg7[%c0_27, %c0_28] : memref<4x1xf32, #tpu.memory_space<vmem>>, vector<4x1xf32>
      %c0_29 = arith.constant 0 : index
      %c0_30 = arith.constant 0 : index
      %52 = vector.load %arg9[%c0_29, %c0_30] : memref<4x1xf32, #tpu.memory_space<vmem>>, vector<4x1xf32>
      tpu.vector_store %arg9[%c0_29, %c0_30], %51 {strides = array<i32>} : memref<4x1xf32, #tpu.memory_space<vmem>>, vector<4x1xf32>,
    } else {
    }
    %c0_i32_1 = arith.constant 0 : i32
    %5 = arith.cmpi eq, %arg2, %c0_i32_1 : i32
    %6 = arith.extui %5 : i1 to i32
    %c0_i32_2 = arith.constant 0 : i32
    %7 = arith.cmpi ne, %6, %c0_i32_2 : i32
    scf.if %7 {
      %cst_23 = arith.constant 0xFF800000 : f32
      %49 = vector.broadcast %cst_23 : f32 to vector<4x1xf32>
      %c0_24 = arith.constant 0 : index
      %c0_25 = arith.constant 0 : index
      %50 = vector.load %arg6[%c0_24, %c0_25] : memref<4x1xf32, #tpu.memory_space<vmem>>, vector<4x1xf32>
      tpu.vector_store %arg6[%c0_24, %c0_25], %49 {strides = array<i32>} : memref<4x1xf32, #tpu.memory_space<vmem>>, vector<4x1xf32>,
      %cst_26 = arith.constant 0.000000e+00 : f32
      %51 = vector.broadcast %cst_26 : f32 to vector<4x1xf32>
      %c0_27 = arith.constant 0 : index
      %c0_28 = arith.constant 0 : index
      %52 = vector.load %arg7[%c0_27, %c0_28] : memref<4x1xf32, #tpu.memory_space<vmem>>, vector<4x1xf32>
      tpu.vector_store %arg7[%c0_27, %c0_28], %51 {strides = array<i32>} : memref<4x1xf32, #tpu.memory_space<vmem>>, vector<4x1xf32>,
    } else {
    }
    %c0 = arith.constant 0 : index
    %c0_3 = arith.constant 0 : index
    %c0_4 = arith.constant 0 : index
    %8 = vector.load %arg3[%c0, %c0_3, %c0_4] : memref<1x4x32xf32, #tpu.memory_space<vmem>>, vector<1x4x32xf32>
    %9 = vector.shape_cast %8 : vector<1x4x32xf32> to vector<4x32xf32>
    %c0_5 = arith.constant 0 : index
    %c0_6 = arith.constant 0 : index
    %c0_7 = arith.constant 0 : index
    %10 = vector.load %arg4[%c0_5, %c0_6, %c0_7] : memref<1x4x32xf32, #tpu.memory_space<vmem>>, vector<1x4x32xf32>
    %11 = vector.shape_cast %10 : vector<1x4x32xf32> to vector<4x32xf32>
    %12 = arith.mulf %9, %9 : vector<4x32xf32>
    %cst = arith.constant dense<0.000000e+00> : vector<4xf32>
    %13 = vector.multi_reduction <add>, %12, %cst [1] : vector<4x32xf32> to vector<4xf32>
    %14 = vector.shape_cast %13 : vector<4xf32> to vector<4x1xf32>
    %cst_8 = arith.constant 1.000000e-24 : f32
    %15 = vector.broadcast %cst_8 : f32 to vector<4x1xf32>
    %16 = arith.maximumf %14, %15 : vector<4x1xf32>
    %17 = math.rsqrt %16 : vector<4x1xf32>
    %18 = vector.broadcast %17 : vector<4x1xf32> to vector<4x32xf32>
    %19 = arith.mulf %9, %18 : vector<4x32xf32>
    %20 = arith.mulf %11, %11 : vector<4x32xf32>
    %cst_9 = arith.constant dense<0.000000e+00> : vector<4xf32>
    %21 = vector.multi_reduction <add>, %20, %cst_9 [1] : vector<4x32xf32> to vector<4xf32>
    %22 = vector.shape_cast %21 : vector<4xf32> to vector<4x1xf32>
    %cst_10 = arith.constant 1.000000e-24 : f32
    %23 = vector.broadcast %cst_10 : f32 to vector<4x1xf32>
    %24 = arith.maximumf %22, %23 : vector<4x1xf32>
    %25 = math.rsqrt %24 : vector<4x1xf32>
    %26 = vector.broadcast %25 : vector<4x1xf32> to vector<4x32xf32>
    %27 = arith.mulf %11, %26 : vector<4x32xf32>
    %cst_11 = arith.constant 14.2857141 : f32
    %28 = vector.broadcast %cst_11 : f32 to vector<4x32xf32>
    %29 = arith.mulf %19, %28 : vector<4x32xf32>
    %cst_12 = arith.constant dense<0.000000e+00> : vector<4x4xf32>
    %30 = tpu.matmul %29, %27, %cst_12 {dimension_numbers = #tpu.dot_dimension_numbers<[1], [1], [0], [0], [0, 0, 1, 0], [], []>} : vector<4x32xf32>, vector<4x32xf32>, vector<4x4xf32> -> vector<4x4xf32>
    %cst_13 = arith.constant dense<0xFF800000> : vector<4xf32>
    %31 = vector.multi_reduction <maximumf>, %30, %cst_13 [1] : vector<4x4xf32> to vector<4xf32>
    %32 = vector.shape_cast %31 : vector<4xf32> to vector<4x1xf32>
    %c0_14 = arith.constant 0 : index
    %c0_15 = arith.constant 0 : index
    %33 = vector.load %arg6[%c0_14, %c0_15] : memref<4x1xf32, #tpu.memory_space<vmem>>, vector<4x1xf32>
    %34 = arith.maximumf %33, %32 : vector<4x1xf32>
    %35 = arith.subf %33, %34 : vector<4x1xf32>
    %36 = math.exp %35 : vector<4x1xf32>
    %37 = arith.cmpi eq, %arg0, %arg2 : i32
    %38 = arith.extui %37 : i1 to i32
    %c0_i32_16 = arith.constant 0 : i32
    %39 = arith.cmpi ne, %38, %c0_i32_16 : i32
    scf.if %39 {
      %49 = tpu.iota {dimensions = array<i32: 0>} : vector<4x4xi32>
      %50 = tpu.iota {dimensions = array<i32: 1>} : vector<4x4xi32>
      %51 = arith.cmpi eq, %49, %50 : vector<4x4xi32>
      %cst_23 = arith.constant -1.000000e+30 : f32
      %52 = vector.broadcast %cst_23 : f32 to vector<4x4xf32>
      %53 = arith.select %51, %52, %30 : vector<4x4xi1>, vector<4x4xf32>
      %54 = vector.broadcast %34 : vector<4x1xf32> to vector<4x4xf32>
      %55 = arith.subf %53, %54 : vector<4x4xf32>
      %56 = math.exp %55 : vector<4x4xf32>
      %c0_24 = arith.constant 0 : index
      %c0_25 = arith.constant 0 : index
      %57 = vector.load %arg7[%c0_24, %c0_25] : memref<4x1xf32, #tpu.memory_space<vmem>>, vector<4x1xf32>
      %58 = arith.mulf %36, %57 : vector<4x1xf32>
      %cst_26 = arith.constant dense<0.000000e+00> : vector<4xf32>
      %59 = vector.multi_reduction <add>, %56, %cst_26 [1] : vector<4x4xf32> to vector<4xf32>
      %60 = vector.shape_cast %59 : vector<4xf32> to vector<4x1xf32>
      %61 = arith.addf %58, %60 : vector<4x1xf32>
      %c0_27 = arith.constant 0 : index
      %c0_28 = arith.constant 0 : index
      %62 = vector.load %arg7[%c0_27, %c0_28] : memref<4x1xf32, #tpu.memory_space<vmem>>, vector<4x1xf32>
      tpu.vector_store %arg7[%c0_27, %c0_28], %61 {strides = array<i32>} : memref<4x1xf32, #tpu.memory_space<vmem>>, vector<4x1xf32>,
      %c0_i32_29 = arith.constant 0 : i32
      %63 = arith.cmpi eq, %arg1, %c0_i32_29 : i32
      %64 = arith.extui %63 : i1 to i32
      %c0_i32_30 = arith.constant 0 : i32
      %65 = arith.cmpi ne, %64, %c0_i32_30 : i32
      scf.if %65 {
        %cst_31 = arith.constant 0.000000e+00 : f32
        %66 = vector.broadcast %cst_31 : f32 to vector<4x4xf32>
        %67 = arith.select %51, %30, %66 : vector<4x4xi1>, vector<4x4xf32>
        %cst_32 = arith.constant dense<0.000000e+00> : vector<4xf32>
        %68 = vector.multi_reduction <add>, %67, %cst_32 [1] : vector<4x4xf32> to vector<4xf32>
        %69 = vector.shape_cast %68 : vector<4xf32> to vector<4x1xf32>
        %c0_33 = arith.constant 0 : index
        %c0_34 = arith.constant 0 : index
        %70 = vector.load %arg10[%c0_33, %c0_34] : memref<4x1xf32, #tpu.memory_space<vmem>>, vector<4x1xf32>
        tpu.vector_store %arg10[%c0_33, %c0_34], %69 {strides = array<i32>} : memref<4x1xf32, #tpu.memory_space<vmem>>, vector<4x1xf32>,
      } else {
      }
    } else {
    }
    %true = arith.constant true
    %40 = arith.xori %37, %true : i1
    %41 = arith.extui %40 : i1 to i32
    %c0_i32_17 = arith.constant 0 : i32
    %42 = arith.cmpi ne, %41, %c0_i32_17 : i32
    scf.if %42 {
      %49 = vector.broadcast %34 : vector<4x1xf32> to vector<4x4xf32>
      %50 = arith.subf %30, %49 : vector<4x4xf32>
      %51 = math.exp %50 : vector<4x4xf32>
      %c0_23 = arith.constant 0 : index
      %c0_24 = arith.constant 0 : index
      %52 = vector.load %arg7[%c0_23, %c0_24] : memref<4x1xf32, #tpu.memory_space<vmem>>, vector<4x1xf32>
      %53 = arith.mulf %36, %52 : vector<4x1xf32>
      %cst_25 = arith.constant dense<0.000000e+00> : vector<4xf32>
      %54 = vector.multi_reduction <add>, %51, %cst_25 [1] : vector<4x4xf32> to vector<4xf32>
      %55 = vector.shape_cast %54 : vector<4xf32> to vector<4x1xf32>
      %56 = arith.addf %53, %55 : vector<4x1xf32>
      %c0_26 = arith.constant 0 : index
      %c0_27 = arith.constant 0 : index
      %57 = vector.load %arg7[%c0_26, %c0_27] : memref<4x1xf32, #tpu.memory_space<vmem>>, vector<4x1xf32>
      tpu.vector_store %arg7[%c0_26, %c0_27], %56 {strides = array<i32>} : memref<4x1xf32, #tpu.memory_space<vmem>>, vector<4x1xf32>,
    } else {
    }
    %c0_18 = arith.constant 0 : index
    %c0_19 = arith.constant 0 : index
    %43 = vector.load %arg6[%c0_18, %c0_19] : memref<4x1xf32, #tpu.memory_space<vmem>>, vector<4x1xf32>
    tpu.vector_store %arg6[%c0_18, %c0_19], %34 {strides = array<i32>} : memref<4x1xf32, #tpu.memory_space<vmem>>, vector<4x1xf32>,
    %c1_i32_20 = arith.constant 1 : i32
    %44 = arith.cmpi eq, %arg1, %c1_i32_20 : i32
    %c0_i32_21 = arith.constant 0 : i32
    %45 = arith.cmpi eq, %arg2, %c0_i32_21 : i32
    %46 = arith.andi %44, %45 : i1
    %47 = arith.extui %46 : i1 to i32
    %c0_i32_22 = arith.constant 0 : i32
    %48 = arith.cmpi ne, %47, %c0_i32_22 : i32
    scf.if %48 {
      %c0_23 = arith.constant 0 : index
      %c0_24 = arith.constant 0 : index
      %49 = vector.load %arg10[%c0_23, %c0_24] : memref<4x1xf32, #tpu.memory_space<vmem>>, vector<4x1xf32>
      %c0_25 = arith.constant 0 : index
      %c0_26 = arith.constant 0 : index
      %50 = vector.load %arg8[%c0_25, %c0_26] : memref<4x1xf32, #tpu.memory_space<vmem>>, vector<4x1xf32>
      %51 = arith.subf %49, %50 : vector<4x1xf32>
      %c0_27 = arith.constant 0 : index
      %c0_28 = arith.constant 0 : index
      %52 = vector.load %arg9[%c0_27, %c0_28] : memref<4x1xf32, #tpu.memory_space<vmem>>, vector<4x1xf32>
      %c0_29 = arith.constant 0 : index
      %c0_30 = arith.constant 0 : index
      %53 = vector.load %arg7[%c0_29, %c0_30] : memref<4x1xf32, #tpu.memory_space<vmem>>, vector<4x1xf32>
      %54 = arith.addf %52, %53 : vector<4x1xf32>
      %55 = math.log %54 : vector<4x1xf32>
      %56 = arith.subf %51, %55 : vector<4x1xf32>
      %c0_31 = arith.constant 0 : index
      %c0_32 = arith.constant 0 : index
      %57 = vector.load %arg5[%c0_31, %c0_32] : memref<4x1xf32, #tpu.memory_space<vmem>>, vector<4x1xf32>
      tpu.vector_store %arg5[%c0_31, %c0_32], %56 {strides = array<i32>} : memref<4x1xf32, #tpu.memory_space<vmem>>, vector<4x1xf32>,
    } else {
    }
    return
  }
  func.func @transform_0(%arg0: i32, %arg1: i32, %arg2: i32) -> (i32, i32, i32) {
    %c0_i32 = arith.constant 0 : i32
    %c0_i32_0 = arith.constant 0 : i32
    %c0_i32_1 = arith.constant 0 : i32
    return %c0_i32, %arg0, %c0_i32_0 : i32, i32, i32
  }
  func.func @transform_1(%arg0: i32, %arg1: i32, %arg2: i32) -> (i32, i32, i32) {
    %c1_i32 = arith.constant 1 : i32
    %0 = arith.subi %c1_i32, %arg1 : i32
    %c0_i32 = arith.constant 0 : i32
    %c0_i32_0 = arith.constant 0 : i32
    return %0, %arg2, %c0_i32 : i32, i32, i32
  }
  func.func @transform_2(%arg0: i32, %arg1: i32, %arg2: i32) -> (i32, i32) {
    %c0_i32 = arith.constant 0 : i32
    %c0_i32_0 = arith.constant 0 : i32
    return %arg0, %c0_i32 : i32, i32
  }
}

</mosaic_0001>

<llo_original>
// kernel: tpu_custom_call.1
$region0: #{tpu_custom_call.1}
  #allocation0 [shape = 'u32[]', space=smem, size = 0x4, offset = 0x4, fixed_abs, tag = 'smem constant byte address 0x4 - core index']
  #allocation1 [shape = 'u32[144,128]{1,0:T(1,128)}', space=vmem, size = 0x12000, scoped, tag = 'internal scratch']
  #allocation2 [shape = 'f32[4,1]{1,0:T(4,128)}', space=vmem, size = 0x800, scoped, tag = 'scratch operand']
  #allocation3 [shape = 'f32[4,1]{1,0:T(4,128)}', space=vmem, size = 0x800, scoped, tag = 'scratch operand']
  #allocation4 [shape = 'f32[4,1]{1,0:T(4,128)}', space=vmem, size = 0x800, scoped, tag = 'scratch operand']
  #allocation5 [shape = 'f32[4,1]{1,0:T(4,128)}', space=vmem, size = 0x800, scoped, tag = 'scratch operand']
  #allocation6 [shape = 'f32[4,1]{1,0:T(4,128)}', space=vmem, size = 0x800, scoped, tag = 'scratch operand']
  %s0 = inlined_call_operand.hbm [shape: f32[2,4,32], index: 0, kind: input, shape index: {}]
  %s1 = inlined_call_operand.hbm [shape: f32[2,4,32], index: 1, kind: input, shape index: {}]
  %s2 = inlined_call_operand.vmem [shape: f32[4,1], index: 2, kind: output, shape index: {}]
  %s3 = sld [smem:[#allocation0]]
  $region73: #{tpu_custom_call.1} parent=0
    _
  %s5 = ssub.s32 1, %s3
  %s6 = scalar_select 0, %s5, %s3
  $region1: #{tpu_custom_call.1} parent=0
    #allocation7 [shape = 'u8[2048]{0}', space=vmem, size = 0x800, scoped, tag = 'input window, operand 0, single buffered']
    #allocation8 [shape = 's32[2]{0}', space=sflag, size = 0x8, scoped, tag = 'scoped memory for tpu_custom_call.1']
    #allocation9 [shape = 'u8[4096]{0}', space=vmem, size = 0x1000, scoped, tag = 'input window, operand 1']
    #allocation10 [shape = 's32[2]{0}', space=sflag, size = 0x8, scoped, tag = 'scoped memory for tpu_custom_call.1']
    %7 = vsyncpa [#allocation8], 0
    %8 = vsyncpa [#allocation10], 0
    %s9 = scalar_lea.sflag [#allocation10], 1
    %10 = vsyncpa %s9, 0
    loop: start=0, step=1, limit=4
    $region2: #{tpu_custom_call.1} parent=1 // loop_pre_header
      _
    $region3: #{tpu_custom_call.1} parent=1 // loop_header
      %s12 = sphi 0, %s16
      %p13 = scmp.ge.s32.totalorder %s12, 4
      %s19 = sphi 0, %s38
      %s20 = sphi 0, %s34
      %s21 = sphi 0, %s30
      %s22 = sphi 0, %s19
      %s23 = sphi 0, %s20
      %s24 = sphi 0, %s21
      %s25 = sphi 0, %s22
      %s26 = sphi 0, %s23
      %s27 = sphi 0, %s24
      %s41 = sphi 0, %s43
      %s44 = sphi 0, %s41
      %s45 = sphi 0, %s44
      %s61 = sphi 0, %s45
      %s71 = sphi 0, %s73
      %s74 = sphi 0, %s71
      %s75 = sphi 0, %s74
      %s91 = sphi 0, %s75
      %s97 = sphi 0, %s99
      %s100 = sphi 0, %s97
      %s101 = sphi 0, %s100
      %s117 = sphi 0, %s101
    $region4: #{tpu_custom_call.1} parent=1 // loop_header_branch
      %15 = sbr.rel (%p13) target = $region8
    $region5: #{tpu_custom_call.1} parent=1 // loop_body
      %s17 = ssub.s32 %s12, 1
      %s18 = ssub.s32 %s12, 2
      %s28 = sadd.s32 1, %s21
      %p29 = scmp.ge.s32.totalorder %s28, 1
      %s30 = scalar_select %p29, 0, %s28
      %s31 = sadd.s32 1, %s20
      %s32 = scalar_select %p29, %s31, %s20
      %p33 = scmp.ge.s32.totalorder %s32, 2
      %s34 = scalar_select %p33, 0, %s32
      %s35 = sadd.s32 1, %s19
      %s36 = scalar_select %p33, %s35, %s19
      %p37 = scmp.ge.s32.totalorder %s36, 1
      %s38 = scalar_select %p37, 0, %s36
      %s39 = ssub.s32 %s19, %s38
      %p40 = scmp.eq.s32.totalorder %s39, 0
      %s42 = sadd.s32 %s41, 1
      %s43 = scalar_select %p40, %s41, %s42
      %p46 = pneg %p40
      %p47 = scmp.eq.s32.totalorder %s12, 1
      %p48 = por %p46, %p47
      %p49 = scmp.ne.s32.totalorder %s41, %s44
      %p50 = scmp.eq.s32.totalorder %s12, 0
      %p51 = por %p49, %p50
      %p52 = scmp.ne.s32.totalorder %s41, %s44
      %p53 = scmp.eq.s32.totalorder %s17, 1
      %p54 = por %p52, %p53
      %p55 = scmp.ne.s32.totalorder %s44, %s45
      %p56 = scmp.eq.s32.totalorder %s17, 0
      %p57 = por %p55, %p56
      %p58 = scmp.ne.s32.totalorder %s44, %s45
      %p59 = scmp.eq.s32.totalorder %s18, 1
      %p60 = por %p58, %p59
      %p62 = scmp.ne.s32.totalorder %s45, %s61
      %p63 = scmp.eq.s32.totalorder %s18, 0
      %p64 = por %p62, %p63
      %s65 = ssub.s32 1, %s20
      %s66 = ssub.s32 1, %s34
      %s67 = ssub.s32 %s65, %s66
      %s68 = ssub.s32 %s21, %s30
      %s69 = sor.u32 %s67, %s68
      %p70 = scmp.eq.s32.totalorder %s69, 0
      %s72 = sadd.s32 %s71, 1
      %s73 = scalar_select %p70, %s71, %s72
      %p76 = pneg %p70
      %p77 = scmp.eq.s32.totalorder %s12, 1
      %p78 = por %p76, %p77
      %p79 = scmp.ne.s32.totalorder %s71, %s74
      %p80 = scmp.eq.s32.totalorder %s12, 0
      %p81 = por %p79, %p80
      %p82 = scmp.ne.s32.totalorder %s71, %s74
      %p83 = scmp.eq.s32.totalorder %s17, 1
      %p84 = por %p82, %p83
      %p85 = scmp.ne.s32.totalorder %s74, %s75
      %p86 = scmp.eq.s32.totalorder %s17, 0
      %p87 = por %p85, %p86
      %p88 = scmp.ne.s32.totalorder %s74, %s75
      %p89 = scmp.eq.s32.totalorder %s18, 1
      %p90 = por %p88, %p89
      %p92 = scmp.ne.s32.totalorder %s75, %s91
      %p93 = scmp.eq.s32.totalorder %s18, 0
      %p94 = por %p92, %p93
      %s95 = ssub.s32 %s19, %s38
      %p96 = scmp.eq.s32.totalorder %s95, 0
      %s98 = sadd.s32 %s97, 1
      %s99 = scalar_select %p96, %s97, %s98
      %p102 = pneg %p96
      %p103 = scmp.eq.s32.totalorder %s12, 1
      %p104 = por %p102, %p103
      %p105 = scmp.ne.s32.totalorder %s97, %s100
      %p106 = scmp.eq.s32.totalorder %s12, 0
      %p107 = por %p105, %p106
      %p108 = scmp.ne.s32.totalorder %s97, %s100
      %p109 = scmp.eq.s32.totalorder %s17, 1
      %p110 = por %p108, %p109
      %p111 = scmp.ne.s32.totalorder %s100, %s101
      %p112 = scmp.eq.s32.totalorder %s17, 0
      %p113 = por %p111, %p112
      %p114 = scmp.ne.s32.totalorder %s100, %s101
      %p115 = scmp.eq.s32.totalorder %s18, 1
      %p116 = por %p114, %p115
      %p118 = scmp.ne.s32.totalorder %s101, %s117
      %p119 = scmp.eq.s32.totalorder %s18, 0
      %p120 = por %p118, %p119
      %p121 = scmp.le.s32.totalorder 1, %s12
      %p122 = scmp.lt.s32.totalorder %s12, 3
      %p123 = pnand %p121, %p122
      %p124 = pneg %p123
      // Predicated region
      $region9: #{tpu_custom_call.1} parent=5 // pred_check
        _
      $region10: #{tpu_custom_call.1} parent=5 // pred_check_branch
        %126 = sbr.rel (%p123) target = $region12
      $region11: #{tpu_custom_call.1} parent=5 // pred_region
        %s127 = ssub.s32 %s12, 1
        // Predicated region
        $region13: #{tpu_custom_call.1} parent=11 // pred_check
          %p128 = pneg %p57
        $region14: #{tpu_custom_call.1} parent=11 // pred_check_branch
          %130 = sbr.rel (%p128) target = $region16
        $region15: #{tpu_custom_call.1} parent=11 // pred_region
          %s132 = ssub.s32 64, 64
          %133 = vsyncadd [#allocation8], %s132
          %s134 = smul.addr %s22, 64
          %s135 = scalar_lea.hbm %s0, %s134
          %s137 = sshll.u32 [#allocation7], 4
          %s138 = int_to_ptr.vmem [resolvable:$true] %s137
          %140 = dma.hbm_to_vmem [thread:$0]  %s135, 64, %s138, [#allocation8]
        $region16: #{tpu_custom_call.1} parent=11 // pred_fallthru
          _
      $region12: #{tpu_custom_call.1} parent=5 // pred_fallthru
        _
      %p141 = scmp.lt.s32.totalorder %s12, 2
      // Predicated region
      $region17: #{tpu_custom_call.1} parent=5 // pred_check
        %p142 = pneg %p141
      $region18: #{tpu_custom_call.1} parent=5 // pred_check_branch
        %144 = sbr.rel (%p142) target = $region20
      $region19: #{tpu_custom_call.1} parent=5 // pred_region
        // Predicated region
        $region21: #{tpu_custom_call.1} parent=19 // pred_check
          %p145 = pneg %p81
        $region22: #{tpu_custom_call.1} parent=19 // pred_check_branch
          %147 = sbr.rel (%p145) target = $region24
        $region23: #{tpu_custom_call.1} parent=19 // pred_region
          %s148 = sand.u32 %s71, 1
          %s149 = scalar_lea.sflag [#allocation10], %s148
          %s150 = sand.u32 %s71, 1
          %s151 = smul.addr %s150, 4
          %s152 = scalar_lea.vmem [#allocation9], %s151
          %s153 = ssub.s32 1, %s20
          %s155 = ssub.s32 64, 64
          %156 = vsyncadd %s149, %s155
          %s157 = sadd.s32 %s21, %s153
          %s158 = smul.addr %s157, 64
          %s159 = scalar_lea.hbm %s1, %s158
          %s161 = sshll.u32 %s152, 4
          %s162 = int_to_ptr.vmem [resolvable:$true] %s161
          %164 = dma.hbm_to_vmem [thread:$0]  %s159, 64, %s162, %s149
        $region24: #{tpu_custom_call.1} parent=19 // pred_fallthru
          _
      $region20: #{tpu_custom_call.1} parent=5 // pred_fallthru
        _
      %p165 = scmp.le.s32.totalorder 1, %s12
      %p166 = scmp.lt.s32.totalorder %s12, 3
      %p167 = pnand %p165, %p166
      %p168 = pneg %p167
      // Predicated region
      $region25: #{tpu_custom_call.1} parent=5 // pred_check
        _
      $region26: #{tpu_custom_call.1} parent=5 // pred_check_branch
        %170 = sbr.rel (%p167) target = $region28
      $region27: #{tpu_custom_call.1} parent=5 // pred_region
        %s171 = ssub.s32 %s12, 1
        // Predicated region
        $region29: #{tpu_custom_call.1} parent=27 // pred_check
          %p172 = pneg %p57
        $region30: #{tpu_custom_call.1} parent=27 // pred_check_branch
          %174 = sbr.rel (%p172) target = $region32
        $region31: #{tpu_custom_call.1} parent=27 // pred_region
          %175 = dma.done [#allocation8], 64
        $region32: #{tpu_custom_call.1} parent=27 // pred_fallthru
          _
        %s176 = sand.u32 %s74, 1
        %s177 = scalar_lea.sflag [#allocation10], %s176
        %s178 = sand.u32 %s74, 1
        %s179 = smul.addr %s178, 4
        %s180 = scalar_lea.vmem [#allocation9], %s179
        // Predicated region
        $region33: #{tpu_custom_call.1} parent=27 // pred_check
          %p181 = pneg %p87
        $region34: #{tpu_custom_call.1} parent=27 // pred_check_branch
          %183 = sbr.rel (%p181) target = $region36
        $region35: #{tpu_custom_call.1} parent=27 // pred_region
          %184 = dma.done %s177, 64
        $region36: #{tpu_custom_call.1} parent=27 // pred_fallthru
          _
        %p185 = pneg %p57
        %p186 = pneg %p54
        %s187 = sand.u32 %s74, 1
        %s188 = scalar_lea.sflag [#allocation10], %s187
        %s189 = sand.u32 %s74, 1
        %s190 = smul.addr %s189, 4
        %s191 = scalar_lea.vmem [#allocation9], %s190
        %p192 = pneg %p87
        %p193 = pneg %p84
        %p194 = pneg %p113
        %p195 = pneg %p110
        %p196 = scmp.lt.s32.totalorder %s22, 0
        %s197 = scalar_select %p196, %s22, 0
        %s198 = smul.addr %s197, 4
        %s199 = scalar_lea.vmem %s2, %s198
        %s200 = ssub.s32 1, %s23
        %p201 = scmp.lt.s32.totalorder %s22, 0
        %s202 = scalar_select %p201, %s22, 0
        %s203 = smul.addr %s202, 4
        %s204 = scalar_lea.vmem %s2, %s203
        %p205 = scmp.eq.s32.totalorder %s24, 0
        %p206 = scmp.eq.s32.totalorder %s23, 1
        %p207 = pnand %p205, %p206
        %p208 = pneg %p207
        // Predicated region
        $region37: #{tpu_custom_call.1} parent=27 // pred_check
          _
        $region38: #{tpu_custom_call.1} parent=27 // pred_check_branch
          %210 = sbr.rel (%p207) target = $region40
        $region39: #{tpu_custom_call.1} parent=27 // pred_region
          %v211 = vld [vmem:[#allocation2] sm:$0xf]
          %vm212 = vcmask 3072
          %213 = vst.msk [vmem:[#allocation4] sm:$0xf] %vm212, %v211
          %v214 = vld [vmem:[#allocation3] sm:$0xf]
          %215 = vst.msk [vmem:[#allocation5] sm:$0xf] %vm212, %v214
        $region40: #{tpu_custom_call.1} parent=27 // pred_fallthru
          _
        // Predicated region
        $region41: #{tpu_custom_call.1} parent=27 // pred_check
          %p216 = pneg %p205
        $region42: #{tpu_custom_call.1} parent=27 // pred_check_branch
          %218 = sbr.rel (%p216) target = $region44
        $region43: #{tpu_custom_call.1} parent=27 // pred_region
          %vm219 = vcmask 3072
          %220 = vst.msk [vmem:[#allocation2] sm:$0xf] %vm219, -inf
          %221 = vst.msk [vmem:[#allocation3] sm:$0xf] %vm219, 0.0
        $region44: #{tpu_custom_call.1} parent=27 // pred_fallthru
          _
        %v222 = vld [vmem:[#allocation7] sm:$0xf]
        %v223 = vld [vmem:[%s180] sm:$0xf]
        %v224 = vmul.f32 %v222, %v222
        %vm225 = vcmask 257024
        %v226 = vsel %vm225, %v224, 0.0
        %227 = vadd.xlane.f32.xlu0 %v226
        %v228 = vpop.xlane.xlu0 %227
        %v229 = vmax.f32 %v228, 1e-24
        %v230 = vrsqrt.pop %v229
        %v231 = vmul.f32 %v222, %v230
        %v232 = vmul.f32 %v223, %v223
        %v233 = vsel %vm225, %v232, 0.0
        %234 = vadd.xlane.f32.xlu0 %v233
        %v235 = vpop.xlane.xlu0 %234
        %v236 = vmax.f32 %v235, 1e-24
        %v237 = vrsqrt.pop %v236
        %v238 = vmul.f32 %v223, %v237
        %v239 = vmul.f32 %v231, 14.285714
        %vm240 = vcmask 261120
        %v242 = vsel %vm240, %v239, 0
        %v245 = vsel %vm240, %v238, 0
        %247 = vmatprep.subr.mxu0 0.0
        %248 = vmatpush1.xpose.msra.mxu0 0.0
        %249 = vmatprep.subr.mxu0 0.0
        %250 = vmatpush1.xpose.msra.mxu0 0.0
        %251 = vmatprep.subr.mxu0 0.0
        %252 = vmatpush1.xpose.msra.mxu0 0.0
        %253 = vmatprep.subr.mxu0 0.0
        %254 = vmatpush1.xpose.msra.mxu0 0.0
        %255 = vmatprep.subr.mxu0 0.0
        %256 = vmatpush1.xpose.msra.mxu0 0.0
        %257 = vmatprep.subr.mxu0 0.0
        %258 = vmatpush1.xpose.msra.mxu0 0.0
        %259 = vmatprep.subr.mxu0 0.0
        %260 = vmatpush1.xpose.msra.mxu0 0.0
        %261 = vmatprep.subr.mxu0 0.0
        %262 = vmatpush1.xpose.msra.mxu0 0.0
        %263 = vmatprep.subr.mxu0 0.0
        %264 = vmatpush1.xpose.msra.mxu0 0.0
        %265 = vmatprep.subr.mxu0 0.0
        %266 = vmatpush1.xpose.msra.mxu0 0.0
        %267 = vmatprep.subr.mxu0 0.0
        %268 = vmatpush1.xpose.msra.mxu0 0.0
        %269 = vmatprep.subr.mxu0 0.0
        %270 = vmatpush1.xpose.msra.mxu0 0.0
        %271 = vmatprep.subr.mxu0 0.0
        %272 = vmatpush1.xpose.msra.mxu0 0.0
        %273 = vmatprep.subr.mxu0 0.0
        %274 = vmatpush1.xpose.msra.mxu0 0.0
        %275 = vmatprep.subr.mxu0 0.0
        %276 = vmatpush1.xpose.msra.mxu0 0.0
        %277 = vmatprep.subr.mxu0 0.0
        %278 = vmatpush1.xpose.msra.mxu0 %v245
        %279 = vmatprep.subr.mxu0 0.0
        %280 = vmatpush2.xpose.msra.mxu0 0.0
        %281 = vmatprep.subr.mxu0 0.0
        %282 = vmatpush2.xpose.msra.mxu0 0.0
        %283 = vmatprep.subr.mxu0 0.0
        %284 = vmatpush2.xpose.msra.mxu0 0.0
        %285 = vmatprep.subr.mxu0 0.0
        %286 = vmatpush2.xpose.msra.mxu0 0.0
        %287 = vmatprep.subr.mxu0 0.0
        %288 = vmatpush2.xpose.msra.mxu0 0.0
        %289 = vmatprep.subr.mxu0 0.0
        %290 = vmatpush2.xpose.msra.mxu0 0.0
        %291 = vmatprep.subr.mxu0 0.0
        %292 = vmatpush2.xpose.msra.mxu0 0.0
        %293 = vmatprep.subr.mxu0 0.0
        %294 = vmatpush2.xpose.msra.mxu0 0.0
        %295 = vmatprep.subr.mxu0 0.0
        %296 = vmatpush2.xpose.msra.mxu0 0.0
        %297 = vmatprep.subr.mxu0 0.0
        %298 = vmatpush2.xpose.msra.mxu0 0.0
        %299 = vmatprep.subr.mxu0 0.0
        %300 = vmatpush2.xpose.msra.mxu0 0.0
        %301 = vmatprep.subr.mxu0 0.0
        %302 = vmatpush2.xpose.msra.mxu0 0.0
        %303 = vmatprep.subr.mxu0 0.0
        %304 = vmatpush2.xpose.msra.mxu0 0.0
        %305 = vmatprep.subr.mxu0 0.0
        %306 = vmatpush2.xpose.msra.mxu0 0.0
        %307 = vmatprep.subr.mxu0 0.0
        %308 = vmatpush2.xpose.msra.mxu0 0.0
        %309 = vmatprep.subr.mxu0 0.0
        %310 = vmatpush2.xpose.msra.mxu0 0.0
        %311 = vmatprep.mubr.f32.mxu0 0.0
        %312 = vmatmul.mubr.f32.gmra.mxu0 %v242
        %v313 = vpop.f32.mrf.mxu0
        %v314 = vadd.f32 0.0, %v313
        %v315 = vpop.f32.mrf.mxu0
        %316 = vdwg.mxu0
        %vm317 = vcmask 27648
        %v318 = vsel %vm317, %v314, -inf
        %319 = vmax.xlane.f32.xlu0 %v318
        %v320 = vpop.xlane.xlu0 %319
        %v321 = vld [vmem:[#allocation2] sm:$0xf]
        %v322 = vmax.f32 %v321, %v320
        %v323 = vsub.f32 %v321, %v322
        %v324 = vmul.f32 %v323, 1.442695
        %v325 = vpow.pop %v324
        %p326 = scmp.eq.s32.totalorder %s22, %s24
        // Predicated region
        $region45: #{tpu_custom_call.1} parent=27 // pred_check
          %p327 = pneg %p326
        $region46: #{tpu_custom_call.1} parent=27 // pred_check_branch
          %329 = sbr.rel (%p327) target = $region48
        $region47: #{tpu_custom_call.1} parent=27 // pred_region
          %v330 = vlaneseq
          %v331 = vshrl.u32 %v330, 7
          %v332 = vlaneseq
          %v333 = vand.u32 %v332, 127
          %vm334 = vcmp.eq.s32.totalorder %v331, %v333
          %v335 = vsel %vm334, -1e+30, %v314
          %337 = vset.pattern.permute.xlu0 0
          %338 = vperm.xlu0 %337, %v322
          %v339 = vpop.permute.xlu0 %338
          %v341 = vsub.f32 %v335, %v339
          %v342 = vmul.f32 %v341, 1.442695
          %v343 = vpow.pop %v342
          %v344 = vld [vmem:[#allocation3] sm:$0xf]
          %v345 = vmul.f32 %v325, %v344
          %v346 = vsel %vm317, %v343, 0.0
          %347 = vadd.xlane.f32.xlu0 %v346
          %v348 = vpop.xlane.xlu0 %347
          %v349 = vadd.f32 %v345, %v348
          %vm350 = vcmask 3072
          %351 = vst.msk [vmem:[#allocation3] sm:$0xf] %vm350, %v349
          %p352 = scmp.eq.s32.totalorder %s23, 0
          // Predicated region
          $region49: #{tpu_custom_call.1} parent=47 // pred_check
            %p353 = pneg %p352
          $region50: #{tpu_custom_call.1} parent=47 // pred_check_branch
            %355 = sbr.rel (%p353) target = $region52
          $region51: #{tpu_custom_call.1} parent=47 // pred_region
            %v356 = vsel %vm334, %v314, 0.0
            %v357 = vsel %vm317, %v356, 0.0
            %358 = vadd.xlane.f32.xlu0 %v357
            %v359 = vpop.xlane.xlu0 %358
            %360 = vst.msk [vmem:[#allocation6] sm:$0xf] %vm350, %v359
          $region52: #{tpu_custom_call.1} parent=47 // pred_fallthru
            _
        $region48: #{tpu_custom_call.1} parent=27 // pred_fallthru
          _
        %p361 = scmp.ne.s32.totalorder %s22, %s24
        // Predicated region
        $region53: #{tpu_custom_call.1} parent=27 // pred_check
          %p362 = pneg %p361
        $region54: #{tpu_custom_call.1} parent=27 // pred_check_branch
          %364 = sbr.rel (%p362) target = $region56
        $region55: #{tpu_custom_call.1} parent=27 // pred_region
          %366 = vset.pattern.permute.xlu0 0
          %367 = vperm.xlu0 %366, %v322
          %v368 = vpop.permute.xlu0 %367
          %v370 = vsub.f32 %v314, %v368
          %v371 = vmul.f32 %v370, 1.442695
          %v372 = vpow.pop %v371
          %v373 = vld [vmem:[#allocation3] sm:$0xf]
          %v374 = vmul.f32 %v325, %v373
          %v375 = vsel %vm317, %v372, 0.0
          %376 = vadd.xlane.f32.xlu0 %v375
          %v377 = vpop.xlane.xlu0 %376
          %v378 = vadd.f32 %v374, %v377
          %vm379 = vcmask 3072
          %380 = vst.msk [vmem:[#allocation3] sm:$0xf] %vm379, %v378
        $region56: #{tpu_custom_call.1} parent=27 // pred_fallthru
          _
        %vm381 = vcmask 3072
        %382 = vst.msk [vmem:[#allocation2] sm:$0xf] %vm381, %v322
        // Predicated region
        $region57: #{tpu_custom_call.1} parent=27 // pred_check
          _
        $region58: #{tpu_custom_call.1} parent=27 // pred_check_branch
          %384 = sbr.rel (%p207) target = $region60
        $region59: #{tpu_custom_call.1} parent=27 // pred_region
          %v385 = vld [vmem:[#allocation6] sm:$0xf]
          %v386 = vld [vmem:[#allocation4] sm:$0xf]
          %v387 = vsub.f32 %v385, %v386
          %v388 = vld [vmem:[#allocation5] sm:$0xf]
          %v389 = vld [vmem:[#allocation3] sm:$0xf]
          %v390 = vadd.f32 %v388, %v389
          %v391 = vlog2.pop %v390
          %v392 = vmul.f32 %v391, 0.6931472
          %v393 = vsub.f32 %v387, %v392
          %394 = vst.msk [vmem:[%s204] sm:$0xf] %vm381, %v393
        $region60: #{tpu_custom_call.1} parent=27 // pred_fallthru
          _
        %p395 = scmp.lt.s32.totalorder %s22, 0
        %s396 = scalar_select %p395, %s22, 0
        %s397 = smul.addr %s396, 4
        %s398 = scalar_lea.vmem %s2, %s397
        // Predicated region
        $region61: #{tpu_custom_call.1} parent=27 // pred_check
          %p399 = pneg %p110
        $region62: #{tpu_custom_call.1} parent=27 // pred_check_branch
          %401 = sbr.rel (%p399) target = $region64
        $region63: #{tpu_custom_call.1} parent=27 // pred_region
          _
        $region64: #{tpu_custom_call.1} parent=27 // pred_fallthru
          _
        // Predicated region
        $region65: #{tpu_custom_call.1} parent=27 // pred_check
          %p402 = pneg %p110
        $region66: #{tpu_custom_call.1} parent=27 // pred_check_branch
          %404 = sbr.rel (%p402) target = $region68
        $region67: #{tpu_custom_call.1} parent=27 // pred_region
          %p405 = scmp.lt.s32.totalorder %s22, 0
          %s406 = scalar_select %p405, %s22, 0
          %s407 = smul.addr %s406, 4
          %s408 = scalar_lea.vmem %s2, %s407
        $region68: #{tpu_custom_call.1} parent=27 // pred_fallthru
          _
      $region28: #{tpu_custom_call.1} parent=5 // pred_fallthru
        _
      %p409 = scmp.le.s32.totalorder 2, %s12
      // Predicated region
      $region69: #{tpu_custom_call.1} parent=5 // pred_check
        %p410 = pneg %p409
      $region70: #{tpu_custom_call.1} parent=5 // pred_check_branch
        %412 = sbr.rel (%p410) target = $region72
      $region71: #{tpu_custom_call.1} parent=5 // pred_region
        %s413 = ssub.s32 %s12, 2
      $region72: #{tpu_custom_call.1} parent=5 // pred_fallthru
        _
    $region6: #{tpu_custom_call.1} parent=1 // loop_footer
      %s16 = sadd.s32 1, %s12
    $region7: #{tpu_custom_call.1} parent=1 // loop_footer_branch
      %11 = sbr.rel target = $region3
    $region8: #{tpu_custom_call.1} parent=1 // loop_exit
      _
    %414 = vsyncpa [#allocation8], 1
    %s415 = scalar_lea.sflag [#allocation8], 1
    %416 = vsyncpa %s415, 1
    %417 = vsyncpa [#allocation10], 1
    %s418 = scalar_lea.sflag [#allocation10], 1
    %419 = vsyncpa %s418, 1

</llo_original>
